<compile_context>
chip_gen: v5e
topology: v5e:2x2
jax: 0.10.0
libtpu: 0.0.40
codegen_flags: <defaults>
</compile_context>

<pallas_src>
import jax
import jax.numpy as jnp
import numpy as np
from jax import lax
from jax.experimental import pallas as pl
from jax.experimental.pallas import tpu as pltpu

HIDDEN_SIZE = 32
INPUT_SIZE = 2
OUTPUT_SIZE = 1
TAU = 2.0          # LIFNode(tau=2.0)
V_TH = 1.0         # v_threshold=1.0, v_reset=0.0 (hard reset)

_UNROLL_T_LIMIT = 64   # fully unroll the time loop up to this many steps


def snn_fused_kernel(x_ref, w1t_ref, b1_ref, w2_ref, b2_ref, out_ref):
    """Entire SNN time recurrence for one batch tile (batch-on-lanes layout).

    x_ref  : (T, D, Bt)  spike train tile, batch on lanes
    w1t_ref: (H, D)      fc1 weight, transposed to (out_features, in_features)
    b1_ref : (H, 1)      fc1 bias column
    w2_ref : (H, 1)      fc2 weight column (OUTPUT_SIZE == 1)
    b2_ref : (1,)        fc2 bias scalar (SMEM)
    out_ref: (1, Bt)     sum of second-half output spikes (lane-dense)
    """
    T, D, Bt = x_ref.shape
    H = w1t_ref.shape[0]
    inv_tau = jnp.float32(1.0 / TAU)
    half = T // 2

    # --- loop-invariant broadcasts hoisted out of the recurrence -----------
    w1cols = [jnp.broadcast_to(w1t_ref[:, d:d + 1], (H, Bt)) for d in range(D)]
    b1b = jnp.broadcast_to(b1_ref[...], (H, Bt))
    w2b = jnp.broadcast_to(w2_ref[...], (H, Bt))
    b2v = b2_ref[0]

    def lif_step(x_t, v1, v2):
        # fc1 (D == 2): two exact-f32 VPU FMAs against lane-broadcast weight
        # columns; x_t rows broadcast over sublanes.  Same math as x_t @ w1 + b1.
        h1 = b1b
        for d in range(D):
            h1 = h1 + w1cols[d] * x_t[d:d + 1, :]
        # LIF1 (decay_input=True, hard reset to 0)
        v1 = v1 + (h1 - v1) * inv_tau
        s1 = (v1 >= V_TH).astype(jnp.float32)
        v1 = v1 * (1.0 - s1)
        # fc2 (O == 1): VPU multiply + sublane reduction over H
        h2 = jnp.sum(s1 * w2b, axis=0, keepdims=True) + b2v
        # LIF2
        v2 = v2 + (h2 - v2) * inv_tau
        s2 = (v2 >= V_TH).astype(jnp.float32)
        v2 = v2 * (1.0 - s2)
        return v1, v2, s2

    v1 = jnp.zeros((H, Bt), jnp.float32)    # functional.reset_net(self)
    v2 = jnp.zeros((1, Bt), jnp.float32)
    acc = jnp.zeros((1, Bt), jnp.float32)

    if T <= _UNROLL_T_LIMIT:
        # Small T: full static unroll — static slices, LLO sees every step.
        for t in range(T):
            v1, v2, s2 = lif_step(x_ref[t], v1, v2)
            if t >= half:
                acc = acc + s2
    else:
        # Large T: bounded live ranges; moderate unroll keeps LLO visibility
        # without exploding compile time / vreg pressure.  The second-half
        # accumulation gets its own loop so no per-step predicate is needed.
        def warm_body(t, carry):
            v1, v2 = carry
            v1, v2, _ = lif_step(x_ref[t], v1, v2)
            return v1, v2

        v1, v2 = lax.fori_loop(0, half, warm_body, (v1, v2), unroll=8)

        def acc_body(t, carry):
            v1, v2, acc = carry
            v1, v2, s2 = lif_step(x_ref[t], v1, v2)
            return v1, v2, acc + s2

        v1, v2, acc = lax.fori_loop(half, T, acc_body, (v1, v2, acc), unroll=8)

    out_ref[...] = acc.astype(out_ref.dtype)


def delayed_xor_snn_forward(x, w1, b1, w2, b2, *, block_b=None):
    """x: [B, T, D] float32 spike train; returns [B, OUTPUT_SIZE] float32.

    Weights stored (in_features, out_features); biases (1, out_features).
    """
    B, T, D = x.shape
    H = w1.shape[1]
    O = w2.shape[1]
    assert O == 1, "fc2 VPU reduction path assumes OUTPUT_SIZE == 1 (per module spec)"

    # Lane-dense batch tiles: multiples of 128 lanes.  Small batches pad to one
    # tile; large batches get >= 4 tiles for pipelining / megacore sharding.
    if block_b is None:
        block_b = 128 if B <= 2048 else 256
    assert block_b % 128 == 0, "block_b must be a multiple of the 128-wide lane axis"
    num_tiles = pl.cdiv(max(B, 1), block_b)
    Bp = num_tiles * block_b

    # Wrapper-side layout plumbing (one-off, XLA ops):
    #   x: [B, T, D] -> [T, D, Bp]  (batch on lanes, zero-padded lanes unused)
    xt = jnp.transpose(x, (1, 2, 0))
    if Bp != B:
        xt = jnp.pad(xt, ((0, 0), (0, 0), (0, Bp - B)))
    w1t = jnp.transpose(w1)                          # (H, D)
    b1c = jnp.reshape(b1, (H, 1))                    # (H, 1) column
    w2c = jnp.reshape(w2, (H, O))                    # (H, 1) column
    b2s = jnp.reshape(b2, (O,)).astype(jnp.float32)  # (1,) SMEM scalar

    out = pl.pallas_call(
        snn_fused_kernel,
        out_shape=jax.ShapeDtypeStruct((1, Bp), jnp.float32),
        grid=(num_tiles,),
        in_specs=[
            pl.BlockSpec((T, D, block_b), lambda i: (0, 0, i)),          # x tile
            pl.BlockSpec((H, D), lambda i: (0, 0)),                      # w1^T (resident)
            pl.BlockSpec((H, 1), lambda i: (0, 0)),                      # b1 column
            pl.BlockSpec((H, 1), lambda i: (0, 0)),                      # w2 column
            pl.BlockSpec(memory_space=pltpu.MemorySpace.SMEM),           # b2 scalar
        ],
        out_specs=pl.BlockSpec((1, block_b), lambda i: (0, i)),          # lane-dense
        compiler_params=pltpu.CompilerParams(
            dimension_semantics=("parallel",)),                          # batch tiles independent
    )(xt, w1t, b1c, w2c, b2s)

    # Free reshape back to the module's [B, 1] output.
    return out[0, :B].reshape(B, 1)


def reference_forward(x, w1, b1, w2, b2):
    """Pure-JAX reference mirroring the PyTorch forward.

    Uses the same elementwise fc1/fc2 accumulation structure as the kernel so
    the hard-threshold spikes cannot flip due to matmul-pass rounding.
    """
    B, T, D = x.shape
    H, O = w1.shape[1], w2.shape[1]
    v1 = jnp.zeros((B, H), jnp.float32)
    v2 = jnp.zeros((B, O), jnp.float32)
    acc = jnp.zeros((B, O), jnp.float32)
    for t in range(T):
        h1 = jnp.broadcast_to(b1, (B, H))
        for d in range(D):
            h1 = h1 + x[:, t, d:d + 1] * w1[d:d + 1, :]
        v1 = v1 + (h1 - v1) / TAU
        s1 = (v1 >= V_TH).astype(jnp.float32)
        v1 = v1 * (1.0 - s1)
        h2 = jnp.sum(s1 * w2[:, 0], axis=-1, keepdims=True) + b2
        v2 = v2 + (h2 - v2) / TAU
        s2 = (v2 >= V_TH).astype(jnp.float32)
        v2 = v2 * (1.0 - s2)
        if t >= T // 2:
            acc = acc + s2
    return acc


def init_linear(key, fan_in, fan_out):
    """Deterministic PyTorch-style nn.Linear init: U(-1/sqrt(fan_in), 1/sqrt(fan_in))."""
    kw, kb = jax.random.split(key)
    bound = 1.0 / np.sqrt(fan_in)
    w = jax.random.uniform(kw, (fan_in, fan_out), jnp.float32, -bound, bound)
    b = jax.random.uniform(kb, (1, fan_out), jnp.float32, -bound, bound)
    return w, b


if __name__ == "__main__":
    key = jax.random.PRNGKey(0)
    k_x, k_fc1, k_fc2 = jax.random.split(key, 3)

    B, T = 4, 8  # [batch, time, feature] consistent with the module
    # binary spike-train input, as in the delayed-XOR task
    x = jax.random.bernoulli(k_x, 0.5, (B, T, INPUT_SIZE)).astype(jnp.float32)

    w1, b1 = init_linear(k_fc1, INPUT_SIZE, HIDDEN_SIZE)
    w2, b2 = init_linear(k_fc2, HIDDEN_SIZE, OUTPUT_SIZE)

    out = delayed_xor_snn_forward(x, w1, b1, w2, b2)
    out = jax.block_until_ready(out)

    ref = reference_forward(x, w1, b1, w2, b2)
    np.testing.assert_allclose(np.asarray(out), np.asarray(ref), rtol=1e-5, atol=1e-5)

    print("KERNEL_OK")
</pallas_src>

<mosaic_0001>
module attributes {stable_mosaic.version = 11 : i64} {
  func.func @snn_fused_kernel(%arg0: i32, %arg1: memref<8x2x128xf32, #tpu.memory_space<vmem>>, %arg2: memref<32x2xf32, #tpu.memory_space<vmem>>, %arg3: memref<32x1xf32, #tpu.memory_space<vmem>>, %arg4: memref<32x1xf32, #tpu.memory_space<vmem>>, %arg5: memref<1xf32, #tpu.memory_space<smem>>, %arg6: memref<1x128xf32, #tpu.memory_space<vmem>>) attributes {dimension_semantics = [#tpu.dimension_semantics<parallel>], iteration_bounds = array<i64: 1>, scalar_prefetch = 0 : i64, scratch_operands = 0 : i64, tpu.core_type = #tpu.core_type<tc>, window_params = [{transform_indices = @transform_0, window_bounds = array<i64: 8, 2, 128>}, {pipeline_mode = #tpu.pipeline_mode<synchronous>, transform_indices = @transform_1, window_bounds = array<i64: 32, 2>}, {pipeline_mode = #tpu.pipeline_mode<synchronous>, transform_indices = @transform_2, window_bounds = array<i64: 32, 1>}, {pipeline_mode = #tpu.pipeline_mode<synchronous>, transform_indices = @transform_3, window_bounds = array<i64: 32, 1>}, {transform_indices = @transform_4, window_bounds = array<i64: 1>}, {transform_indices = @transform_5, window_bounds = array<i64: 1, 128>}]} {
    %c0 = arith.constant 0 : index
    %c0_0 = arith.constant 0 : index
    %0 = vector.load %arg2[%c0, %c0_0] : memref<32x2xf32, #tpu.memory_space<vmem>>, vector<32x1xf32>
    %1 = vector.shape_cast %0 : vector<32x1xf32> to vector<32x1xf32>
    %2 = vector.broadcast %1 : vector<32x1xf32> to vector<32x128xf32>
    %c0_1 = arith.constant 0 : index
    %c1 = arith.constant 1 : index
    %3 = vector.load %arg2[%c0_1, %c1] : memref<32x2xf32, #tpu.memory_space<vmem>>, vector<32x1xf32>
    %4 = vector.shape_cast %3 : vector<32x1xf32> to vector<32x1xf32>
    %5 = vector.broadcast %4 : vector<32x1xf32> to vector<32x128xf32>
    %c0_2 = arith.constant 0 : index
    %c0_3 = arith.constant 0 : index
    %6 = vector.load %arg3[%c0_2, %c0_3] : memref<32x1xf32, #tpu.memory_space<vmem>>, vector<32x1xf32>
    %7 = vector.shape_cast %6 : vector<32x1xf32> to vector<32x1xf32>
    %8 = vector.broadcast %7 : vector<32x1xf32> to vector<32x128xf32>
    %c0_4 = arith.constant 0 : index
    %c0_5 = arith.constant 0 : index
    %9 = vector.load %arg4[%c0_4, %c0_5] : memref<32x1xf32, #tpu.memory_space<vmem>>, vector<32x1xf32>
    %10 = vector.shape_cast %9 : vector<32x1xf32> to vector<32x1xf32>
    %11 = vector.broadcast %10 : vector<32x1xf32> to vector<32x128xf32>
    %c0_6 = arith.constant 0 : index
    %12 = memref.load %arg5[%c0_6] : memref<1xf32, #tpu.memory_space<smem>>
    %cst = arith.constant 0.000000e+00 : f32
    %13 = vector.broadcast %cst : f32 to vector<32x128xf32>
    %cst_7 = arith.constant 0.000000e+00 : f32
    %14 = vector.broadcast %cst_7 : f32 to vector<1x128xf32>
    %cst_8 = arith.constant 0.000000e+00 : f32
    %15 = vector.broadcast %cst_8 : f32 to vector<1x128xf32>
    %c0_9 = arith.constant 0 : index
    %c0_10 = arith.constant 0 : index
    %c0_11 = arith.constant 0 : index
    %16 = vector.load %arg1[%c0_9, %c0_10, %c0_11] : memref<8x2x128xf32, #tpu.memory_space<vmem>>, vector<1x2x128xf32>
    %17 = vector.shape_cast %16 : vector<1x2x128xf32> to vector<2x128xf32>
    %18 = vector.extract_strided_slice %17 {offsets = [0, 0], sizes = [1, 128], strides = [1, 1]} : vector<2x128xf32> to vector<1x128xf32>
    %19 = vector.broadcast %18 : vector<1x128xf32> to vector<32x128xf32>
    %20 = arith.mulf %2, %19 : vector<32x128xf32>
    %21 = arith.addf %8, %20 : vector<32x128xf32>
    %22 = vector.extract_strided_slice %17 {offsets = [1, 0], sizes = [1, 128], strides = [1, 1]} : vector<2x128xf32> to vector<1x128xf32>
    %23 = vector.broadcast %22 : vector<1x128xf32> to vector<32x128xf32>
    %24 = arith.mulf %5, %23 : vector<32x128xf32>
    %25 = arith.addf %21, %24 : vector<32x128xf32>
    %26 = arith.subf %25, %13 : vector<32x128xf32>
    %cst_12 = arith.constant 5.000000e-01 : f32
    %27 = vector.broadcast %cst_12 : f32 to vector<32x128xf32>
    %28 = arith.mulf %26, %27 : vector<32x128xf32>
    %29 = arith.addf %13, %28 : vector<32x128xf32>
    %cst_13 = arith.constant 1.000000e+00 : f32
    %30 = vector.broadcast %cst_13 : f32 to vector<32x128xf32>
    %31 = arith.cmpf oge, %29, %30 : vector<32x128xf32>
    %32 = arith.extui %31 : vector<32x128xi1> to vector<32x128xi32>
    %33 = arith.sitofp %32 : vector<32x128xi32> to vector<32x128xf32>
    %cst_14 = arith.constant 1.000000e+00 : f32
    %34 = vector.broadcast %cst_14 : f32 to vector<32x128xf32>
    %35 = arith.subf %34, %33 : vector<32x128xf32>
    %36 = arith.mulf %29, %35 : vector<32x128xf32>
    %37 = arith.mulf %33, %11 : vector<32x128xf32>
    %cst_15 = arith.constant dense<0.000000e+00> : vector<128xf32>
    %38 = vector.multi_reduction <add>, %37, %cst_15 [0] : vector<32x128xf32> to vector<128xf32>
    %39 = vector.shape_cast %38 : vector<128xf32> to vector<1x128xf32>
    %40 = vector.broadcast %12 : f32 to vector<1x128xf32>
    %41 = arith.addf %39, %40 : vector<1x128xf32>
    %42 = arith.subf %41, %14 : vector<1x128xf32>
    %cst_16 = arith.constant 5.000000e-01 : f32
    %43 = vector.broadcast %cst_16 : f32 to vector<1x128xf32>
    %44 = arith.mulf %42, %43 : vector<1x128xf32>
    %45 = arith.addf %14, %44 : vector<1x128xf32>
    %cst_17 = arith.constant 1.000000e+00 : f32
    %46 = vector.broadcast %cst_17 : f32 to vector<1x128xf32>
    %47 = arith.cmpf oge, %45, %46 : vector<1x128xf32>
    %48 = arith.extui %47 : vector<1x128xi1> to vector<1x128xi32>
    %49 = arith.sitofp %48 : vector<1x128xi32> to vector<1x128xf32>
    %cst_18 = arith.constant 1.000000e+00 : f32
    %50 = vector.broadcast %cst_18 : f32 to vector<1x128xf32>
    %51 = arith.subf %50, %49 : vector<1x128xf32>
    %52 = arith.mulf %45, %51 : vector<1x128xf32>
    %c1_19 = arith.constant 1 : index
    %c0_20 = arith.constant 0 : index
    %c0_21 = arith.constant 0 : index
    %53 = vector.load %arg1[%c1_19, %c0_20, %c0_21] : memref<8x2x128xf32, #tpu.memory_space<vmem>>, vector<1x2x128xf32>
    %54 = vector.shape_cast %53 : vector<1x2x128xf32> to vector<2x128xf32>
    %55 = vector.extract_strided_slice %54 {offsets = [0, 0], sizes = [1, 128], strides = [1, 1]} : vector<2x128xf32> to vector<1x128xf32>
    %56 = vector.broadcast %55 : vector<1x128xf32> to vector<32x128xf32>
    %57 = arith.mulf %2, %56 : vector<32x128xf32>
    %58 = arith.addf %8, %57 : vector<32x128xf32>
    %59 = vector.extract_strided_slice %54 {offsets = [1, 0], sizes = [1, 128], strides = [1, 1]} : vector<2x128xf32> to vector<1x128xf32>
    %60 = vector.broadcast %59 : vector<1x128xf32> to vector<32x128xf32>
    %61 = arith.mulf %5, %60 : vector<32x128xf32>
    %62 = arith.addf %58, %61 : vector<32x128xf32>
    %63 = arith.subf %62, %36 : vector<32x128xf32>
    %cst_22 = arith.constant 5.000000e-01 : f32
    %64 = vector.broadcast %cst_22 : f32 to vector<32x128xf32>
    %65 = arith.mulf %63, %64 : vector<32x128xf32>
    %66 = arith.addf %36, %65 : vector<32x128xf32>
    %cst_23 = arith.constant 1.000000e+00 : f32
    %67 = vector.broadcast %cst_23 : f32 to vector<32x128xf32>
    %68 = arith.cmpf oge, %66, %67 : vector<32x128xf32>
    %69 = arith.extui %68 : vector<32x128xi1> to vector<32x128xi32>
    %70 = arith.sitofp %69 : vector<32x128xi32> to vector<32x128xf32>
    %cst_24 = arith.constant 1.000000e+00 : f32
    %71 = vector.broadcast %cst_24 : f32 to vector<32x128xf32>
    %72 = arith.subf %71, %70 : vector<32x128xf32>
    %73 = arith.mulf %66, %72 : vector<32x128xf32>
    %74 = arith.mulf %70, %11 : vector<32x128xf32>
    %cst_25 = arith.constant dense<0.000000e+00> : vector<128xf32>
    %75 = vector.multi_reduction <add>, %74, %cst_25 [0] : vector<32x128xf32> to vector<128xf32>
    %76 = vector.shape_cast %75 : vector<128xf32> to vector<1x128xf32>
    %77 = vector.broadcast %12 : f32 to vector<1x128xf32>
    %78 = arith.addf %76, %77 : vector<1x128xf32>
    %79 = arith.subf %78, %52 : vector<1x128xf32>
    %cst_26 = arith.constant 5.000000e-01 : f32
    %80 = vector.broadcast %cst_26 : f32 to vector<1x128xf32>
    %81 = arith.mulf %79, %80 : vector<1x128xf32>
    %82 = arith.addf %52, %81 : vector<1x128xf32>
    %cst_27 = arith.constant 1.000000e+00 : f32
    %83 = vector.broadcast %cst_27 : f32 to vector<1x128xf32>
    %84 = arith.cmpf oge, %82, %83 : vector<1x128xf32>
    %85 = arith.extui %84 : vector<1x128xi1> to vector<1x128xi32>
    %86 = arith.sitofp %85 : vector<1x128xi32> to vector<1x128xf32>
    %cst_28 = arith.constant 1.000000e+00 : f32
    %87 = vector.broadcast %cst_28 : f32 to vector<1x128xf32>
    %88 = arith.subf %87, %86 : vector<1x128xf32>
    %89 = arith.mulf %82, %88 : vector<1x128xf32>
    %c2 = arith.constant 2 : index
    %c0_29 = arith.constant 0 : index
    %c0_30 = arith.constant 0 : index
    %90 = vector.load %arg1[%c2, %c0_29, %c0_30] : memref<8x2x128xf32, #tpu.memory_space<vmem>>, vector<1x2x128xf32>
    %91 = vector.shape_cast %90 : vector<1x2x128xf32> to vector<2x128xf32>
    %92 = vector.extract_strided_slice %91 {offsets = [0, 0], sizes = [1, 128], strides = [1, 1]} : vector<2x128xf32> to vector<1x128xf32>
    %93 = vector.broadcast %92 : vector<1x128xf32> to vector<32x128xf32>
    %94 = arith.mulf %2, %93 : vector<32x128xf32>
    %95 = arith.addf %8, %94 : vector<32x128xf32>
    %96 = vector.extract_strided_slice %91 {offsets = [1, 0], sizes = [1, 128], strides = [1, 1]} : vector<2x128xf32> to vector<1x128xf32>
    %97 = vector.broadcast %96 : vector<1x128xf32> to vector<32x128xf32>
    %98 = arith.mulf %5, %97 : vector<32x128xf32>
    %99 = arith.addf %95, %98 : vector<32x128xf32>
    %100 = arith.subf %99, %73 : vector<32x128xf32>
    %cst_31 = arith.constant 5.000000e-01 : f32
    %101 = vector.broadcast %cst_31 : f32 to vector<32x128xf32>
    %102 = arith.mulf %100, %101 : vector<32x128xf32>
    %103 = arith.addf %73, %102 : vector<32x128xf32>
    %cst_32 = arith.constant 1.000000e+00 : f32
    %104 = vector.broadcast %cst_32 : f32 to vector<32x128xf32>
    %105 = arith.cmpf oge, %103, %104 : vector<32x128xf32>
    %106 = arith.extui %105 : vector<32x128xi1> to vector<32x128xi32>
    %107 = arith.sitofp %106 : vector<32x128xi32> to vector<32x128xf32>
    %cst_33 = arith.constant 1.000000e+00 : f32
    %108 = vector.broadcast %cst_33 : f32 to vector<32x128xf32>
    %109 = arith.subf %108, %107 : vector<32x128xf32>
    %110 = arith.mulf %103, %109 : vector<32x128xf32>
    %111 = arith.mulf %107, %11 : vector<32x128xf32>
    %cst_34 = arith.constant dense<0.000000e+00> : vector<128xf32>
    %112 = vector.multi_reduction <add>, %111, %cst_34 [0] : vector<32x128xf32> to vector<128xf32>
    %113 = vector.shape_cast %112 : vector<128xf32> to vector<1x128xf32>
    %114 = vector.broadcast %12 : f32 to vector<1x128xf32>
    %115 = arith.addf %113, %114 : vector<1x128xf32>
    %116 = arith.subf %115, %89 : vector<1x128xf32>
    %cst_35 = arith.constant 5.000000e-01 : f32
    %117 = vector.broadcast %cst_35 : f32 to vector<1x128xf32>
    %118 = arith.mulf %116, %117 : vector<1x128xf32>
    %119 = arith.addf %89, %118 : vector<1x128xf32>
    %cst_36 = arith.constant 1.000000e+00 : f32
    %120 = vector.broadcast %cst_36 : f32 to vector<1x128xf32>
    %121 = arith.cmpf oge, %119, %120 : vector<1x128xf32>
    %122 = arith.extui %121 : vector<1x128xi1> to vector<1x128xi32>
    %123 = arith.sitofp %122 : vector<1x128xi32> to vector<1x128xf32>
    %cst_37 = arith.constant 1.000000e+00 : f32
    %124 = vector.broadcast %cst_37 : f32 to vector<1x128xf32>
    %125 = arith.subf %124, %123 : vector<1x128xf32>
    %126 = arith.mulf %119, %125 : vector<1x128xf32>
    %c3 = arith.constant 3 : index
    %c0_38 = arith.constant 0 : index
    %c0_39 = arith.constant 0 : index
    %127 = vector.load %arg1[%c3, %c0_38, %c0_39] : memref<8x2x128xf32, #tpu.memory_space<vmem>>, vector<1x2x128xf32>
    %128 = vector.shape_cast %127 : vector<1x2x128xf32> to vector<2x128xf32>
    %129 = vector.extract_strided_slice %128 {offsets = [0, 0], sizes = [1, 128], strides = [1, 1]} : vector<2x128xf32> to vector<1x128xf32>
    %130 = vector.broadcast %129 : vector<1x128xf32> to vector<32x128xf32>
    %131 = arith.mulf %2, %130 : vector<32x128xf32>
    %132 = arith.addf %8, %131 : vector<32x128xf32>
    %133 = vector.extract_strided_slice %128 {offsets = [1, 0], sizes = [1, 128], strides = [1, 1]} : vector<2x128xf32> to vector<1x128xf32>
    %134 = vector.broadcast %133 : vector<1x128xf32> to vector<32x128xf32>
    %135 = arith.mulf %5, %134 : vector<32x128xf32>
    %136 = arith.addf %132, %135 : vector<32x128xf32>
    %137 = arith.subf %136, %110 : vector<32x128xf32>
    %cst_40 = arith.constant 5.000000e-01 : f32
    %138 = vector.broadcast %cst_40 : f32 to vector<32x128xf32>
    %139 = arith.mulf %137, %138 : vector<32x128xf32>
    %140 = arith.addf %110, %139 : vector<32x128xf32>
    %cst_41 = arith.constant 1.000000e+00 : f32
    %141 = vector.broadcast %cst_41 : f32 to vector<32x128xf32>
    %142 = arith.cmpf oge, %140, %141 : vector<32x128xf32>
    %143 = arith.extui %142 : vector<32x128xi1> to vector<32x128xi32>
    %144 = arith.sitofp %143 : vector<32x128xi32> to vector<32x128xf32>
    %cst_42 = arith.constant 1.000000e+00 : f32
    %145 = vector.broadcast %cst_42 : f32 to vector<32x128xf32>
    %146 = arith.subf %145, %144 : vector<32x128xf32>
    %147 = arith.mulf %140, %146 : vector<32x128xf32>
    %148 = arith.mulf %144, %11 : vector<32x128xf32>
    %cst_43 = arith.constant dense<0.000000e+00> : vector<128xf32>
    %149 = vector.multi_reduction <add>, %148, %cst_43 [0] : vector<32x128xf32> to vector<128xf32>
    %150 = vector.shape_cast %149 : vector<128xf32> to vector<1x128xf32>
    %151 = vector.broadcast %12 : f32 to vector<1x128xf32>
    %152 = arith.addf %150, %151 : vector<1x128xf32>
    %153 = arith.subf %152, %126 : vector<1x128xf32>
    %cst_44 = arith.constant 5.000000e-01 : f32
    %154 = vector.broadcast %cst_44 : f32 to vector<1x128xf32>
    %155 = arith.mulf %153, %154 : vector<1x128xf32>
    %156 = arith.addf %126, %155 : vector<1x128xf32>
    %cst_45 = arith.constant 1.000000e+00 : f32
    %157 = vector.broadcast %cst_45 : f32 to vector<1x128xf32>
    %158 = arith.cmpf oge, %156, %157 : vector<1x128xf32>
    %159 = arith.extui %158 : vector<1x128xi1> to vector<1x128xi32>
    %160 = arith.sitofp %159 : vector<1x128xi32> to vector<1x128xf32>
    %cst_46 = arith.constant 1.000000e+00 : f32
    %161 = vector.broadcast %cst_46 : f32 to vector<1x128xf32>
    %162 = arith.subf %161, %160 : vector<1x128xf32>
    %163 = arith.mulf %156, %162 : vector<1x128xf32>
    %c4 = arith.constant 4 : index
    %c0_47 = arith.constant 0 : index
    %c0_48 = arith.constant 0 : index
    %164 = vector.load %arg1[%c4, %c0_47, %c0_48] : memref<8x2x128xf32, #tpu.memory_space<vmem>>, vector<1x2x128xf32>
    %165 = vector.shape_cast %164 : vector<1x2x128xf32> to vector<2x128xf32>
    %166 = vector.extract_strided_slice %165 {offsets = [0, 0], sizes = [1, 128], strides = [1, 1]} : vector<2x128xf32> to vector<1x128xf32>
    %167 = vector.broadcast %166 : vector<1x128xf32> to vector<32x128xf32>
    %168 = arith.mulf %2, %167 : vector<32x128xf32>
    %169 = arith.addf %8, %168 : vector<32x128xf32>
    %170 = vector.extract_strided_slice %165 {offsets = [1, 0], sizes = [1, 128], strides = [1, 1]} : vector<2x128xf32> to vector<1x128xf32>
    %171 = vector.broadcast %170 : vector<1x128xf32> to vector<32x128xf32>
    %172 = arith.mulf %5, %171 : vector<32x128xf32>
    %173 = arith.addf %169, %172 : vector<32x128xf32>
    %174 = arith.subf %173, %147 : vector<32x128xf32>
    %cst_49 = arith.constant 5.000000e-01 : f32
    %175 = vector.broadcast %cst_49 : f32 to vector<32x128xf32>
    %176 = arith.mulf %174, %175 : vector<32x128xf32>
    %177 = arith.addf %147, %176 : vector<32x128xf32>
    %cst_50 = arith.constant 1.000000e+00 : f32
    %178 = vector.broadcast %cst_50 : f32 to vector<32x128xf32>
    %179 = arith.cmpf oge, %177, %178 : vector<32x128xf32>
    %180 = arith.extui %179 : vector<32x128xi1> to vector<32x128xi32>
    %181 = arith.sitofp %180 : vector<32x128xi32> to vector<32x128xf32>
    %cst_51 = arith.constant 1.000000e+00 : f32
    %182 = vector.broadcast %cst_51 : f32 to vector<32x128xf32>
    %183 = arith.subf %182, %181 : vector<32x128xf32>
    %184 = arith.mulf %177, %183 : vector<32x128xf32>
    %185 = arith.mulf %181, %11 : vector<32x128xf32>
    %cst_52 = arith.constant dense<0.000000e+00> : vector<128xf32>
    %186 = vector.multi_reduction <add>, %185, %cst_52 [0] : vector<32x128xf32> to vector<128xf32>
    %187 = vector.shape_cast %186 : vector<128xf32> to vector<1x128xf32>
    %188 = vector.broadcast %12 : f32 to vector<1x128xf32>
    %189 = arith.addf %187, %188 : vector<1x128xf32>
    %190 = arith.subf %189, %163 : vector<1x128xf32>
    %cst_53 = arith.constant 5.000000e-01 : f32
    %191 = vector.broadcast %cst_53 : f32 to vector<1x128xf32>
    %192 = arith.mulf %190, %191 : vector<1x128xf32>
    %193 = arith.addf %163, %192 : vector<1x128xf32>
    %cst_54 = arith.constant 1.000000e+00 : f32
    %194 = vector.broadcast %cst_54 : f32 to vector<1x128xf32>
    %195 = arith.cmpf oge, %193, %194 : vector<1x128xf32>
    %196 = arith.extui %195 : vector<1x128xi1> to vector<1x128xi32>
    %197 = arith.sitofp %196 : vector<1x128xi32> to vector<1x128xf32>
    %cst_55 = arith.constant 1.000000e+00 : f32
    %198 = vector.broadcast %cst_55 : f32 to vector<1x128xf32>
    %199 = arith.subf %198, %197 : vector<1x128xf32>
    %200 = arith.mulf %193, %199 : vector<1x128xf32>
    %201 = arith.addf %15, %197 : vector<1x128xf32>
    %c5 = arith.constant 5 : index
    %c0_56 = arith.constant 0 : index
    %c0_57 = arith.constant 0 : index
    %202 = vector.load %arg1[%c5, %c0_56, %c0_57] : memref<8x2x128xf32, #tpu.memory_space<vmem>>, vector<1x2x128xf32>
    %203 = vector.shape_cast %202 : vector<1x2x128xf32> to vector<2x128xf32>
    %204 = vector.extract_strided_slice %203 {offsets = [0, 0], sizes = [1, 128], strides = [1, 1]} : vector<2x128xf32> to vector<1x128xf32>
    %205 = vector.broadcast %204 : vector<1x128xf32> to vector<32x128xf32>
    %206 = arith.mulf %2, %205 : vector<32x128xf32>
    %207 = arith.addf %8, %206 : vector<32x128xf32>
    %208 = vector.extract_strided_slice %203 {offsets = [1, 0], sizes = [1, 128], strides = [1, 1]} : vector<2x128xf32> to vector<1x128xf32>
    %209 = vector.broadcast %208 : vector<1x128xf32> to vector<32x128xf32>
    %210 = arith.mulf %5, %209 : vector<32x128xf32>
    %211 = arith.addf %207, %210 : vector<32x128xf32>
    %212 = arith.subf %211, %184 : vector<32x128xf32>
    %cst_58 = arith.constant 5.000000e-01 : f32
    %213 = vector.broadcast %cst_58 : f32 to vector<32x128xf32>
    %214 = arith.mulf %212, %213 : vector<32x128xf32>
    %215 = arith.addf %184, %214 : vector<32x128xf32>
    %cst_59 = arith.constant 1.000000e+00 : f32
    %216 = vector.broadcast %cst_59 : f32 to vector<32x128xf32>
    %217 = arith.cmpf oge, %215, %216 : vector<32x128xf32>
    %218 = arith.extui %217 : vector<32x128xi1> to vector<32x128xi32>
    %219 = arith.sitofp %218 : vector<32x128xi32> to vector<32x128xf32>
    %cst_60 = arith.constant 1.000000e+00 : f32
    %220 = vector.broadcast %cst_60 : f32 to vector<32x128xf32>
    %221 = arith.subf %220, %219 : vector<32x128xf32>
    %222 = arith.mulf %215, %221 : vector<32x128xf32>
    %223 = arith.mulf %219, %11 : vector<32x128xf32>
    %cst_61 = arith.constant dense<0.000000e+00> : vector<128xf32>
    %224 = vector.multi_reduction <add>, %223, %cst_61 [0] : vector<32x128xf32> to vector<128xf32>
    %225 = vector.shape_cast %224 : vector<128xf32> to vector<1x128xf32>
    %226 = vector.broadcast %12 : f32 to vector<1x128xf32>
    %227 = arith.addf %225, %226 : vector<1x128xf32>
    %228 = arith.subf %227, %200 : vector<1x128xf32>
    %cst_62 = arith.constant 5.000000e-01 : f32
    %229 = vector.broadcast %cst_62 : f32 to vector<1x128xf32>
    %230 = arith.mulf %228, %229 : vector<1x128xf32>
    %231 = arith.addf %200, %230 : vector<1x128xf32>
    %cst_63 = arith.constant 1.000000e+00 : f32
    %232 = vector.broadcast %cst_63 : f32 to vector<1x128xf32>
    %233 = arith.cmpf oge, %231, %232 : vector<1x128xf32>
    %234 = arith.extui %233 : vector<1x128xi1> to vector<1x128xi32>
    %235 = arith.sitofp %234 : vector<1x128xi32> to vector<1x128xf32>
    %cst_64 = arith.constant 1.000000e+00 : f32
    %236 = vector.broadcast %cst_64 : f32 to vector<1x128xf32>
    %237 = arith.subf %236, %235 : vector<1x128xf32>
    %238 = arith.mulf %231, %237 : vector<1x128xf32>
    %239 = arith.addf %201, %235 : vector<1x128xf32>
    %c6 = arith.constant 6 : index
    %c0_65 = arith.constant 0 : index
    %c0_66 = arith.constant 0 : index
    %240 = vector.load %arg1[%c6, %c0_65, %c0_66] : memref<8x2x128xf32, #tpu.memory_space<vmem>>, vector<1x2x128xf32>
    %241 = vector.shape_cast %240 : vector<1x2x128xf32> to vector<2x128xf32>
    %242 = vector.extract_strided_slice %241 {offsets = [0, 0], sizes = [1, 128], strides = [1, 1]} : vector<2x128xf32> to vector<1x128xf32>
    %243 = vector.broadcast %242 : vector<1x128xf32> to vector<32x128xf32>
    %244 = arith.mulf %2, %243 : vector<32x128xf32>
    %245 = arith.addf %8, %244 : vector<32x128xf32>
    %246 = vector.extract_strided_slice %241 {offsets = [1, 0], sizes = [1, 128], strides = [1, 1]} : vector<2x128xf32> to vector<1x128xf32>
    %247 = vector.broadcast %246 : vector<1x128xf32> to vector<32x128xf32>
    %248 = arith.mulf %5, %247 : vector<32x128xf32>
    %249 = arith.addf %245, %248 : vector<32x128xf32>
    %250 = arith.subf %249, %222 : vector<32x128xf32>
    %cst_67 = arith.constant 5.000000e-01 : f32
    %251 = vector.broadcast %cst_67 : f32 to vector<32x128xf32>
    %252 = arith.mulf %250, %251 : vector<32x128xf32>
    %253 = arith.addf %222, %252 : vector<32x128xf32>
    %cst_68 = arith.constant 1.000000e+00 : f32
    %254 = vector.broadcast %cst_68 : f32 to vector<32x128xf32>
    %255 = arith.cmpf oge, %253, %254 : vector<32x128xf32>
    %256 = arith.extui %255 : vector<32x128xi1> to vector<32x128xi32>
    %257 = arith.sitofp %256 : vector<32x128xi32> to vector<32x128xf32>
    %cst_69 = arith.constant 1.000000e+00 : f32
    %258 = vector.broadcast %cst_69 : f32 to vector<32x128xf32>
    %259 = arith.subf %258, %257 : vector<32x128xf32>
    %260 = arith.mulf %253, %259 : vector<32x128xf32>
    %261 = arith.mulf %257, %11 : vector<32x128xf32>
    %cst_70 = arith.constant dense<0.000000e+00> : vector<128xf32>
    %262 = vector.multi_reduction <add>, %261, %cst_70 [0] : vector<32x128xf32> to vector<128xf32>
    %263 = vector.shape_cast %262 : vector<128xf32> to vector<1x128xf32>
    %264 = vector.broadcast %12 : f32 to vector<1x128xf32>
    %265 = arith.addf %263, %264 : vector<1x128xf32>
    %266 = arith.subf %265, %238 : vector<1x128xf32>
    %cst_71 = arith.constant 5.000000e-01 : f32
    %267 = vector.broadcast %cst_71 : f32 to vector<1x128xf32>
    %268 = arith.mulf %266, %267 : vector<1x128xf32>
    %269 = arith.addf %238, %268 : vector<1x128xf32>
    %cst_72 = arith.constant 1.000000e+00 : f32
    %270 = vector.broadcast %cst_72 : f32 to vector<1x128xf32>
    %271 = arith.cmpf oge, %269, %270 : vector<1x128xf32>
    %272 = arith.extui %271 : vector<1x128xi1> to vector<1x128xi32>
    %273 = arith.sitofp %272 : vector<1x128xi32> to vector<1x128xf32>
    %cst_73 = arith.constant 1.000000e+00 : f32
    %274 = vector.broadcast %cst_73 : f32 to vector<1x128xf32>
    %275 = arith.subf %274, %273 : vector<1x128xf32>
    %276 = arith.mulf %269, %275 : vector<1x128xf32>
    %277 = arith.addf %239, %273 : vector<1x128xf32>
    %c7 = arith.constant 7 : index
    %c0_74 = arith.constant 0 : index
    %c0_75 = arith.constant 0 : index
    %278 = vector.load %arg1[%c7, %c0_74, %c0_75] : memref<8x2x128xf32, #tpu.memory_space<vmem>>, vector<1x2x128xf32>
    %279 = vector.shape_cast %278 : vector<1x2x128xf32> to vector<2x128xf32>
    %280 = vector.extract_strided_slice %279 {offsets = [0, 0], sizes = [1, 128], strides = [1, 1]} : vector<2x128xf32> to vector<1x128xf32>
    %281 = vector.broadcast %280 : vector<1x128xf32> to vector<32x128xf32>
    %282 = arith.mulf %2, %281 : vector<32x128xf32>
    %283 = arith.addf %8, %282 : vector<32x128xf32>
    %284 = vector.extract_strided_slice %279 {offsets = [1, 0], sizes = [1, 128], strides = [1, 1]} : vector<2x128xf32> to vector<1x128xf32>
    %285 = vector.broadcast %284 : vector<1x128xf32> to vector<32x128xf32>
    %286 = arith.mulf %5, %285 : vector<32x128xf32>
    %287 = arith.addf %283, %286 : vector<32x128xf32>
    %288 = arith.subf %287, %260 : vector<32x128xf32>
    %cst_76 = arith.constant 5.000000e-01 : f32
    %289 = vector.broadcast %cst_76 : f32 to vector<32x128xf32>
    %290 = arith.mulf %288, %289 : vector<32x128xf32>
    %291 = arith.addf %260, %290 : vector<32x128xf32>
    %cst_77 = arith.constant 1.000000e+00 : f32
    %292 = vector.broadcast %cst_77 : f32 to vector<32x128xf32>
    %293 = arith.cmpf oge, %291, %292 : vector<32x128xf32>
    %294 = arith.extui %293 : vector<32x128xi1> to vector<32x128xi32>
    %295 = arith.sitofp %294 : vector<32x128xi32> to vector<32x128xf32>
    %296 = arith.mulf %295, %11 : vector<32x128xf32>
    %cst_78 = arith.constant dense<0.000000e+00> : vector<128xf32>
    %297 = vector.multi_reduction <add>, %296, %cst_78 [0] : vector<32x128xf32> to vector<128xf32>
    %298 = vector.shape_cast %297 : vector<128xf32> to vector<1x128xf32>
    %299 = vector.broadcast %12 : f32 to vector<1x128xf32>
    %300 = arith.addf %298, %299 : vector<1x128xf32>
    %301 = arith.subf %300, %276 : vector<1x128xf32>
    %cst_79 = arith.constant 5.000000e-01 : f32
    %302 = vector.broadcast %cst_79 : f32 to vector<1x128xf32>
    %303 = arith.mulf %301, %302 : vector<1x128xf32>
    %304 = arith.addf %276, %303 : vector<1x128xf32>
    %cst_80 = arith.constant 1.000000e+00 : f32
    %305 = vector.broadcast %cst_80 : f32 to vector<1x128xf32>
    %306 = arith.cmpf oge, %304, %305 : vector<1x128xf32>
    %307 = arith.extui %306 : vector<1x128xi1> to vector<1x128xi32>
    %308 = arith.sitofp %307 : vector<1x128xi32> to vector<1x128xf32>
    %309 = arith.addf %277, %308 : vector<1x128xf32>
    %c0_81 = arith.constant 0 : index
    %c0_82 = arith.constant 0 : index
    %310 = vector.load %arg6[%c0_81, %c0_82] : memref<1x128xf32, #tpu.memory_space<vmem>>, vector<1x128xf32>
    tpu.vector_store %arg6[%c0_81, %c0_82], %309 {strides = array<i32>} : memref<1x128xf32, #tpu.memory_space<vmem>>, vector<1x128xf32>,
    return
  }
  func.func @transform_0(%arg0: i32) -> (i32, i32, i32) {
    %c0_i32 = arith.constant 0 : i32
    %c0_i32_0 = arith.constant 0 : i32
    %c0_i32_1 = arith.constant 0 : i32
    return %c0_i32, %c0_i32_0, %arg0 : i32, i32, i32
  }
  func.func @transform_1(%arg0: i32) -> (i32, i32) {
    %c0_i32 = arith.constant 0 : i32
    %c0_i32_0 = arith.constant 0 : i32
    %c0_i32_1 = arith.constant 0 : i32
    return %c0_i32, %c0_i32_0 : i32, i32
  }
  func.func @transform_2(%arg0: i32) -> (i32, i32) {
    %c0_i32 = arith.constant 0 : i32
    %c0_i32_0 = arith.constant 0 : i32
    %c0_i32_1 = arith.constant 0 : i32
    return %c0_i32, %c0_i32_0 : i32, i32
  }
  func.func @transform_3(%arg0: i32) -> (i32, i32) {
    %c0_i32 = arith.constant 0 : i32
    %c0_i32_0 = arith.constant 0 : i32
    %c0_i32_1 = arith.constant 0 : i32
    return %c0_i32, %c0_i32_0 : i32, i32
  }
  func.func @transform_4(%arg0: i32) -> i32 {
    %c0_i32 = arith.constant 0 : i32
    %c0_i32_0 = arith.constant 0 : i32
    return %c0_i32 : i32
  }
  func.func @transform_5(%arg0: i32) -> (i32, i32) {
    %c0_i32 = arith.constant 0 : i32
    %c0_i32_0 = arith.constant 0 : i32
    return %c0_i32, %arg0 : i32, i32
  }
}

</mosaic_0001>

<llo_original>
// kernel: tpu_custom_call.1
$region0: #{tpu_custom_call.1}
  #allocation0 [shape = 'u32[]', space=smem, size = 0x4, offset = 0x4, fixed_abs, tag = 'smem constant byte address 0x4 - core index']
  #allocation1 [shape = 'u32[72,128]{1,0:T(1,128)}', space=vmem, size = 0x9000, scoped, tag = 'internal scratch']
  #allocation2 [shape = 'f32[1]{0:T(128)S(6)}', space=smem, size = 0x200, scoped, tag = 'scoped memory for tpu_custom_call.1']
  %s0 = inlined_call_operand.vmem [shape: f32[8,2,128], index: 0, kind: input, shape index: {}]
  %s1 = inlined_call_operand.vmem [shape: f32[32,2], index: 1, kind: input, shape index: {}]
  %s2 = inlined_call_operand.vmem [shape: f32[32,1], index: 2, kind: input, shape index: {}]
  %s3 = inlined_call_operand.vmem [shape: f32[32,1], index: 3, kind: input, shape index: {}]
  %s4 = inlined_call_operand.<no memory space> [shape: f32[1], index: 4, kind: input, shape index: {}]
  %s5 = inlined_call_operand.hbm [shape: f32[1,128], index: 5, kind: output, shape index: {}]
  %s6 = sld [smem:[#allocation0]]
  $region30: #{tpu_custom_call.1} parent=0
    _
  %s8 = ssub.s32 1, %s6
  %s9 = scalar_select 0, %s8, %s6
  %10 = sst [smem:[#allocation2]] %s4
  $region1: #{tpu_custom_call.1} parent=0
    #allocation3 [shape = 'u8[512]{0}', space=vmem, size = 0x400, scoped, tag = 'output window, operand 0, single buffered']
    #allocation4 [shape = 's32[1]{0}', space=sflag, size = 0x4, scoped, tag = 'scoped memory for tpu_custom_call.1']
    %11 = vsyncpa [#allocation4], 0
    // Predicated region
    $region2: #{tpu_custom_call.1} parent=1 // pred_check
      _
    $region3: #{tpu_custom_call.1} parent=1 // pred_check_branch
      %13 = sbr.rel (0) target = $region5
    $region4: #{tpu_custom_call.1} parent=1 // pred_region
      _
    $region5: #{tpu_custom_call.1} parent=1 // pred_fallthru
      _
    // Predicated region
    $region6: #{tpu_custom_call.1} parent=1 // pred_check
      _
    $region7: #{tpu_custom_call.1} parent=1 // pred_check_branch
      %15 = sbr.rel (0) target = $region9
    $region8: #{tpu_custom_call.1} parent=1 // pred_region
      _
    $region9: #{tpu_custom_call.1} parent=1 // pred_fallthru
      _
    // Predicated region
    $region10: #{tpu_custom_call.1} parent=1 // pred_check
      _
    $region11: #{tpu_custom_call.1} parent=1 // pred_check_branch
      %17 = sbr.rel (0) target = $region13
    $region12: #{tpu_custom_call.1} parent=1 // pred_region
      _
    $region13: #{tpu_custom_call.1} parent=1 // pred_fallthru
      _
    // Predicated region
    $region14: #{tpu_custom_call.1} parent=1 // pred_check
      _
    $region15: #{tpu_custom_call.1} parent=1 // pred_check_branch
      %19 = sbr.rel (0) target = $region17
    $region16: #{tpu_custom_call.1} parent=1 // pred_region
      _
    $region17: #{tpu_custom_call.1} parent=1 // pred_fallthru
      _
    // Predicated region
    $region18: #{tpu_custom_call.1} parent=1 // pred_check
      _
    $region19: #{tpu_custom_call.1} parent=1 // pred_check_branch
      %21 = sbr.rel (0) target = $region21
    $region20: #{tpu_custom_call.1} parent=1 // pred_region
      _
    $region21: #{tpu_custom_call.1} parent=1 // pred_fallthru
      _
    %v22 = vld [vmem:[%s1] sm:$0xff]
    %v23 = vld [vmem:[%s1 + $0x8] sm:$0xff]
    %v24 = vld [vmem:[%s1 + $0x10] sm:$0xff]
    %v25 = vld [vmem:[%s1 + $0x18] sm:$0xff]
    %27 = vset.pattern.permute.xlu0 0
    %28 = vperm.xlu0 %27, %v22
    %v29 = vpop.permute.xlu0 %28
    %32 = vset.pattern.permute.xlu0 0
    %33 = vperm.xlu0 %32, %v23
    %v34 = vpop.permute.xlu0 %33
    %37 = vset.pattern.permute.xlu0 0
    %38 = vperm.xlu0 %37, %v24
    %v39 = vpop.permute.xlu0 %38
    %42 = vset.pattern.permute.xlu0 0
    %43 = vperm.xlu0 %42, %v25
    %v44 = vpop.permute.xlu0 %43
    %46 = vset.pattern.permute.xlu0 1
    %47 = vperm.xlu0 %46, %v22
    %v48 = vpop.permute.xlu0 %47
    %50 = vset.pattern.permute.xlu0 1
    %51 = vperm.xlu0 %50, %v23
    %v52 = vpop.permute.xlu0 %51
    %54 = vset.pattern.permute.xlu0 1
    %55 = vperm.xlu0 %54, %v24
    %v56 = vpop.permute.xlu0 %55
    %58 = vset.pattern.permute.xlu0 1
    %59 = vperm.xlu0 %58, %v25
    %v60 = vpop.permute.xlu0 %59
    %v62 = vld [vmem:[%s2] sm:$0xff]
    %v63 = vld [vmem:[%s2 + $0x8] sm:$0xff]
    %v64 = vld [vmem:[%s2 + $0x10] sm:$0xff]
    %v65 = vld [vmem:[%s2 + $0x18] sm:$0xff]
    %67 = vset.pattern.permute.xlu0 0
    %68 = vperm.xlu0 %67, %v62
    %v69 = vpop.permute.xlu0 %68
    %72 = vset.pattern.permute.xlu0 0
    %73 = vperm.xlu0 %72, %v63
    %v74 = vpop.permute.xlu0 %73
    %77 = vset.pattern.permute.xlu0 0
    %78 = vperm.xlu0 %77, %v64
    %v79 = vpop.permute.xlu0 %78
    %82 = vset.pattern.permute.xlu0 0
    %83 = vperm.xlu0 %82, %v65
    %v84 = vpop.permute.xlu0 %83
    %v86 = vld [vmem:[%s3] sm:$0xff]
    %v87 = vld [vmem:[%s3 + $0x8] sm:$0xff]
    %v88 = vld [vmem:[%s3 + $0x10] sm:$0xff]
    %v89 = vld [vmem:[%s3 + $0x18] sm:$0xff]
    %91 = vset.pattern.permute.xlu0 0
    %92 = vperm.xlu0 %91, %v86
    %v93 = vpop.permute.xlu0 %92
    %96 = vset.pattern.permute.xlu0 0
    %97 = vperm.xlu0 %96, %v87
    %v98 = vpop.permute.xlu0 %97
    %101 = vset.pattern.permute.xlu0 0
    %102 = vperm.xlu0 %101, %v88
    %v103 = vpop.permute.xlu0 %102
    %106 = vset.pattern.permute.xlu0 0
    %107 = vperm.xlu0 %106, %v89
    %v108 = vpop.permute.xlu0 %107
    %s110 = sld [smem:[#allocation2]]
    %v111 = vld [vmem:[%s0] sm:$0x3]
    %v112 = vperm.slane %v111, 0
    %v113 = vmul.f32 %v29, %v112
    %v114 = vmul.f32 %v34, %v112
    %v115 = vmul.f32 %v39, %v112
    %v116 = vmul.f32 %v44, %v112
    %v117 = vadd.f32 %v69, %v113
    %v118 = vadd.f32 %v74, %v114
    %v119 = vadd.f32 %v79, %v115
    %v120 = vadd.f32 %v84, %v116
    %v121 = vperm.slane %v111, 1
    %v122 = vmul.f32 %v48, %v121
    %v123 = vmul.f32 %v52, %v121
    %v124 = vmul.f32 %v56, %v121
    %v125 = vmul.f32 %v60, %v121
    %v126 = vadd.f32 %v117, %v122
    %v127 = vadd.f32 %v118, %v123
    %v128 = vadd.f32 %v119, %v124
    %v129 = vadd.f32 %v120, %v125
    %v130 = vmul.f32 %v126, 0.5
    %v131 = vmul.f32 %v127, 0.5
    %v132 = vmul.f32 %v128, 0.5
    %v133 = vmul.f32 %v129, 0.5
    %v134 = vadd.f32 %v130, 0.0
    %v135 = vadd.f32 %v131, 0.0
    %v136 = vadd.f32 %v132, 0.0
    %v137 = vadd.f32 %v133, 0.0
    %vm138 = vcmp.ge.f32.partialorder %v134, 1.0
    %vm139 = vcmp.ge.f32.partialorder %v135, 1.0
    %vm140 = vcmp.ge.f32.partialorder %v136, 1.0
    %vm141 = vcmp.ge.f32.partialorder %v137, 1.0
    %v142 = vsel %vm138, 1, 0
    %v143 = vsel %vm139, 1, 0
    %v144 = vsel %vm140, 1, 0
    %v145 = vsel %vm141, 1, 0
    %v146 = vcvt.s32.f32 %v142
    %v147 = vcvt.s32.f32 %v143
    %v148 = vcvt.s32.f32 %v144
    %v149 = vcvt.s32.f32 %v145
    %v150 = vsub.f32 1.0, %v146
    %v151 = vsub.f32 1.0, %v147
    %v152 = vsub.f32 1.0, %v148
    %v153 = vsub.f32 1.0, %v149
    %v154 = vmul.f32 %v134, %v150
    %v155 = vmul.f32 %v135, %v151
    %v156 = vmul.f32 %v136, %v152
    %v157 = vmul.f32 %v137, %v153
    %v158 = vmul.f32 %v146, %v93
    %v159 = vmul.f32 %v147, %v98
    %v160 = vmul.f32 %v148, %v103
    %v161 = vmul.f32 %v149, %v108
    %v162 = vadd.f32 %v158, %v159
    %v163 = vadd.f32 %v162, %v160
    %v164 = vadd.f32 %v163, %v161
    %v165 = vrot.slane %v164, 4
    %v166 = vadd.f32 %v164, %v165
    %v167 = vrot.slane %v166, 2
    %v168 = vadd.f32 %v166, %v167
    %v169 = vrot.slane %v168, 1
    %v170 = vadd.f32 %v168, %v169
    %v171 = vstv %s110
    %v172 = vadd.f32 %v170, %v171
    %v173 = vmul.f32 %v172, 0.5
    %v174 = vadd.f32 %v173, 0.0
    %vm175 = vcmp.ge.f32.partialorder %v174, 1.0
    %v176 = vsel %vm175, 1, 0
    %v177 = vcvt.s32.f32 %v176
    %v178 = vsub.f32 1.0, %v177
    %v179 = vmul.f32 %v174, %v178
    %s180 = scalar_lea.vmem %s0, 2
    %v181 = vld [vmem:[%s180] sm:$0x3]
    %v182 = vperm.slane %v181, 0
    %v183 = vmul.f32 %v29, %v182
    %v184 = vmul.f32 %v34, %v182
    %v185 = vmul.f32 %v39, %v182
    %v186 = vmul.f32 %v44, %v182
    %v187 = vadd.f32 %v69, %v183
    %v188 = vadd.f32 %v74, %v184
    %v189 = vadd.f32 %v79, %v185
    %v190 = vadd.f32 %v84, %v186
    %v191 = vperm.slane %v181, 1
    %v192 = vmul.f32 %v48, %v191
    %v193 = vmul.f32 %v52, %v191
    %v194 = vmul.f32 %v56, %v191
    %v195 = vmul.f32 %v60, %v191
    %v196 = vadd.f32 %v187, %v192
    %v197 = vadd.f32 %v188, %v193
    %v198 = vadd.f32 %v189, %v194
    %v199 = vadd.f32 %v190, %v195
    %v200 = vsub.f32 %v196, %v154
    %v201 = vsub.f32 %v197, %v155
    %v202 = vsub.f32 %v198, %v156
    %v203 = vsub.f32 %v199, %v157
    %v204 = vmul.f32 %v200, 0.5
    %v205 = vmul.f32 %v201, 0.5
    %v206 = vmul.f32 %v202, 0.5
    %v207 = vmul.f32 %v203, 0.5
    %v208 = vadd.f32 %v154, %v204
    %v209 = vadd.f32 %v155, %v205
    %v210 = vadd.f32 %v156, %v206
    %v211 = vadd.f32 %v157, %v207
    %vm212 = vcmp.ge.f32.partialorder %v208, 1.0
    %vm213 = vcmp.ge.f32.partialorder %v209, 1.0
    %vm214 = vcmp.ge.f32.partialorder %v210, 1.0
    %vm215 = vcmp.ge.f32.partialorder %v211, 1.0
    %v216 = vsel %vm212, 1, 0
    %v217 = vsel %vm213, 1, 0
    %v218 = vsel %vm214, 1, 0
    %v219 = vsel %vm215, 1, 0
    %v220 = vcvt.s32.f32 %v216
    %v221 = vcvt.s32.f32 %v217
    %v222 = vcvt.s32.f32 %v218
    %v223 = vcvt.s32.f32 %v219
    %v224 = vsub.f32 1.0, %v220
    %v225 = vsub.f32 1.0, %v221
    %v226 = vsub.f32 1.0, %v222
    %v227 = vsub.f32 1.0, %v223
    %v228 = vmul.f32 %v208, %v224
    %v229 = vmul.f32 %v209, %v225
    %v230 = vmul.f32 %v210, %v226
    %v231 = vmul.f32 %v211, %v227
    %v232 = vmul.f32 %v220, %v93
    %v233 = vmul.f32 %v221, %v98
    %v234 = vmul.f32 %v222, %v103
    %v235 = vmul.f32 %v223, %v108
    %v236 = vadd.f32 %v232, %v233
    %v237 = vadd.f32 %v236, %v234
    %v238 = vadd.f32 %v237, %v235
    %v239 = vrot.slane %v238, 4
    %v240 = vadd.f32 %v238, %v239
    %v241 = vrot.slane %v240, 2
    %v242 = vadd.f32 %v240, %v241
    %v243 = vrot.slane %v242, 1
    %v244 = vadd.f32 %v242, %v243
    %v245 = vadd.f32 %v244, %v171
    %v246 = vsub.f32 %v245, %v179
    %v247 = vmul.f32 %v246, 0.5
    %v248 = vadd.f32 %v179, %v247
    %vm249 = vcmp.ge.f32.partialorder %v248, 1.0
    %v250 = vsel %vm249, 1, 0
    %v251 = vcvt.s32.f32 %v250
    %v252 = vsub.f32 1.0, %v251
    %v253 = vmul.f32 %v248, %v252
    %s254 = scalar_lea.vmem %s0, 4
    %v255 = vld [vmem:[%s254] sm:$0x3]
    %v256 = vperm.slane %v255, 0
    %v257 = vmul.f32 %v29, %v256
    %v258 = vmul.f32 %v34, %v256
    %v259 = vmul.f32 %v39, %v256
    %v260 = vmul.f32 %v44, %v256
    %v261 = vadd.f32 %v69, %v257
    %v262 = vadd.f32 %v74, %v258
    %v263 = vadd.f32 %v79, %v259
    %v264 = vadd.f32 %v84, %v260
    %v265 = vperm.slane %v255, 1
    %v266 = vmul.f32 %v48, %v265
    %v267 = vmul.f32 %v52, %v265
    %v268 = vmul.f32 %v56, %v265
    %v269 = vmul.f32 %v60, %v265
    %v270 = vadd.f32 %v261, %v266
    %v271 = vadd.f32 %v262, %v267
    %v272 = vadd.f32 %v263, %v268
    %v273 = vadd.f32 %v264, %v269
    %v274 = vsub.f32 %v270, %v228
    %v275 = vsub.f32 %v271, %v229
    %v276 = vsub.f32 %v272, %v230
    %v277 = vsub.f32 %v273, %v231
    %v278 = vmul.f32 %v274, 0.5
    %v279 = vmul.f32 %v275, 0.5
    %v280 = vmul.f32 %v276, 0.5
    %v281 = vmul.f32 %v277, 0.5
    %v282 = vadd.f32 %v228, %v278
    %v283 = vadd.f32 %v229, %v279
    %v284 = vadd.f32 %v230, %v280
    %v285 = vadd.f32 %v231, %v281
    %vm286 = vcmp.ge.f32.partialorder %v282, 1.0
    %vm287 = vcmp.ge.f32.partialorder %v283, 1.0
    %vm288 = vcmp.ge.f32.partialorder %v284, 1.0
    %vm289 = vcmp.ge.f32.partialorder %v285, 1.0
    %v290 = vsel %vm286, 1, 0
    %v291 = vsel %vm287, 1, 0
    %v292 = vsel %vm288, 1, 0
    %v293 = vsel %vm289, 1, 0
    %v294 = vcvt.s32.f32 %v290
    %v295 = vcvt.s32.f32 %v291
    %v296 = vcvt.s32.f32 %v292
    %v297 = vcvt.s32.f32 %v293
    %v298 = vsub.f32 1.0, %v294
    %v299 = vsub.f32 1.0, %v295
    %v300 = vsub.f32 1.0, %v296
    %v301 = vsub.f32 1.0, %v297
    %v302 = vmul.f32 %v282, %v298
    %v303 = vmul.f32 %v283, %v299
    %v304 = vmul.f32 %v284, %v300
    %v305 = vmul.f32 %v285, %v301
    %v306 = vmul.f32 %v294, %v93
    %v307 = vmul.f32 %v295, %v98
    %v308 = vmul.f32 %v296, %v103
    %v309 = vmul.f32 %v297, %v108
    %v310 = vadd.f32 %v306, %v307
    %v311 = vadd.f32 %v310, %v308
    %v312 = vadd.f32 %v311, %v309
    %v313 = vrot.slane %v312, 4
    %v314 = vadd.f32 %v312, %v313
    %v315 = vrot.slane %v314, 2
    %v316 = vadd.f32 %v314, %v315
    %v317 = vrot.slane %v316, 1
    %v318 = vadd.f32 %v316, %v317
    %v319 = vadd.f32 %v318, %v171
    %v320 = vsub.f32 %v319, %v253
    %v321 = vmul.f32 %v320, 0.5
    %v322 = vadd.f32 %v253, %v321
    %vm323 = vcmp.ge.f32.partialorder %v322, 1.0
    %v324 = vsel %vm323, 1, 0
    %v325 = vcvt.s32.f32 %v324
    %v326 = vsub.f32 1.0, %v325
    %v327 = vmul.f32 %v322, %v326
    %s328 = scalar_lea.vmem %s0, 6
    %v329 = vld [vmem:[%s328] sm:$0x3]
    %v330 = vperm.slane %v329, 0
    %v331 = vmul.f32 %v29, %v330
    %v332 = vmul.f32 %v34, %v330
    %v333 = vmul.f32 %v39, %v330
    %v334 = vmul.f32 %v44, %v330
    %v335 = vadd.f32 %v69, %v331
    %v336 = vadd.f32 %v74, %v332
    %v337 = vadd.f32 %v79, %v333
    %v338 = vadd.f32 %v84, %v334
    %v339 = vperm.slane %v329, 1
    %v340 = vmul.f32 %v48, %v339
    %v341 = vmul.f32 %v52, %v339
    %v342 = vmul.f32 %v56, %v339
    %v343 = vmul.f32 %v60, %v339
    %v344 = vadd.f32 %v335, %v340
    %v345 = vadd.f32 %v336, %v341
    %v346 = vadd.f32 %v337, %v342
    %v347 = vadd.f32 %v338, %v343
    %v348 = vsub.f32 %v344, %v302
    %v349 = vsub.f32 %v345, %v303
    %v350 = vsub.f32 %v346, %v304
    %v351 = vsub.f32 %v347, %v305
    %v352 = vmul.f32 %v348, 0.5
    %v353 = vmul.f32 %v349, 0.5
    %v354 = vmul.f32 %v350, 0.5
    %v355 = vmul.f32 %v351, 0.5
    %v356 = vadd.f32 %v302, %v352
    %v357 = vadd.f32 %v303, %v353
    %v358 = vadd.f32 %v304, %v354
    %v359 = vadd.f32 %v305, %v355
    %vm360 = vcmp.ge.f32.partialorder %v356, 1.0
    %vm361 = vcmp.ge.f32.partialorder %v357, 1.0
    %vm362 = vcmp.ge.f32.partialorder %v358, 1.0
    %vm363 = vcmp.ge.f32.partialorder %v359, 1.0
    %v364 = vsel %vm360, 1, 0
    %v365 = vsel %vm361, 1, 0
    %v366 = vsel %vm362, 1, 0
    %v367 = vsel %vm363, 1, 0
    %v368 = vcvt.s32.f32 %v364
    %v369 = vcvt.s32.f32 %v365
    %v370 = vcvt.s32.f32 %v366
    %v371 = vcvt.s32.f32 %v367
    %v372 = vsub.f32 1.0, %v368
    %v373 = vsub.f32 1.0, %v369
    %v374 = vsub.f32 1.0, %v370
    %v375 = vsub.f32 1.0, %v371
    %v376 = vmul.f32 %v356, %v372
    %v377 = vmul.f32 %v357, %v373
    %v378 = vmul.f32 %v358, %v374
    %v379 = vmul.f32 %v359, %v375
    %v380 = vmul.f32 %v368, %v93
    %v381 = vmul.f32 %v369, %v98
    %v382 = vmul.f32 %v370, %v103
    %v383 = vmul.f32 %v371, %v108
    %v384 = vadd.f32 %v380, %v381
    %v385 = vadd.f32 %v384, %v382
    %v386 = vadd.f32 %v385, %v383
    %v387 = vrot.slane %v386, 4
    %v388 = vadd.f32 %v386, %v387
    %v389 = vrot.slane %v388, 2
    %v390 = vadd.f32 %v388, %v389
    %v391 = vrot.slane %v390, 1
    %v392 = vadd.f32 %v390, %v391
    %v393 = vadd.f32 %v392, %v171
    %v394 = vsub.f32 %v393, %v327
    %v395 = vmul.f32 %v394, 0.5
    %v396 = vadd.f32 %v327, %v395
    %vm397 = vcmp.ge.f32.partialorder %v396, 1.0
    %v398 = vsel %vm397, 1, 0
    %v399 = vcvt.s32.f32 %v398
    %v400 = vsub.f32 1.0, %v399
    %v401 = vmul.f32 %v396, %v400
    %s402 = scalar_lea.vmem %s0, 8
    %v403 = vld [vmem:[%s402] sm:$0x3]
    %v404 = vperm.slane %v403, 0
    %v405 = vmul.f32 %v29, %v404
    %v406 = vmul.f32 %v34, %v404
    %v407 = vmul.f32 %v39, %v404
    %v408 = vmul.f32 %v44, %v404
    %v409 = vadd.f32 %v69, %v405
    %v410 = vadd.f32 %v74, %v406
    %v411 = vadd.f32 %v79, %v407
    %v412 = vadd.f32 %v84, %v408
    %v413 = vperm.slane %v403, 1
    %v414 = vmul.f32 %v48, %v413
    %v415 = vmul.f32 %v52, %v413
    %v416 = vmul.f32 %v56, %v413
    %v417 = vmul.f32 %v60, %v413
    %v418 = vadd.f32 %v409, %v414
    %v419 = vadd.f32 %v410, %v415
    %v420 = vadd.f32 %v411, %v416
    %v421 = vadd.f32 %v412, %v417
    %v422 = vsub.f32 %v418, %v376
    %v423 = vsub.f32 %v419, %v377
    %v424 = vsub.f32 %v420, %v378
    %v425 = vsub.f32 %v421, %v379
    %v426 = vmul.f32 %v422, 0.5
    %v427 = vmul.f32 %v423, 0.5
    %v428 = vmul.f32 %v424, 0.5
    %v429 = vmul.f32 %v425, 0.5
    %v430 = vadd.f32 %v376, %v426
    %v431 = vadd.f32 %v377, %v427
    %v432 = vadd.f32 %v378, %v428
    %v433 = vadd.f32 %v379, %v429
    %vm434 = vcmp.ge.f32.partialorder %v430, 1.0
    %vm435 = vcmp.ge.f32.partialorder %v431, 1.0
    %vm436 = vcmp.ge.f32.partialorder %v432, 1.0
    %vm437 = vcmp.ge.f32.partialorder %v433, 1.0
    %v438 = vsel %vm434, 1, 0
    %v439 = vsel %vm435, 1, 0
    %v440 = vsel %vm436, 1, 0
    %v441 = vsel %vm437, 1, 0
    %v442 = vcvt.s32.f32 %v438
    %v443 = vcvt.s32.f32 %v439
    %v444 = vcvt.s32.f32 %v440
    %v445 = vcvt.s32.f32 %v441
    %v446 = vsub.f32 1.0, %v442
    %v447 = vsub.f32 1.0, %v443
    %v448 = vsub.f32 1.0, %v444
    %v449 = vsub.f32 1.0, %v445
    %v450 = vmul.f32 %v430, %v446
    %v451 = vmul.f32 %v431, %v447
    %v452 = vmul.f32 %v432, %v448
    %v453 = vmul.f32 %v433, %v449
    %v454 = vmul.f32 %v442, %v93
    %v455 = vmul.f32 %v443, %v98
    %v456 = vmul.f32 %v444, %v103
    %v457 = vmul.f32 %v445, %v108
    %v458 = vadd.f32 %v454, %v455
    %v459 = vadd.f32 %v458, %v456
    %v460 = vadd.f32 %v459, %v457
    %v461 = vrot.slane %v460, 4
    %v462 = vadd.f32 %v460, %v461
    %v463 = vrot.slane %v462, 2
    %v464 = vadd.f32 %v462, %v463
    %v465 = vrot.slane %v464, 1
    %v466 = vadd.f32 %v464, %v465
    %v467 = vadd.f32 %v466, %v171
    %v468 = vsub.f32 %v467, %v401
    %v469 = vmul.f32 %v468, 0.5
    %v470 = vadd.f32 %v401, %v469
    %vm471 = vcmp.ge.f32.partialorder %v470, 1.0
    %v472 = vsel %vm471, 1, 0
    %v473 = vcvt.s32.f32 %v472
    %v474 = vsub.f32 1.0, %v473
    %v475 = vmul.f32 %v470, %v474
    %v476 = vadd.f32 %v473, 0.0
    %s477 = scalar_lea.vmem %s0, 10
    %v478 = vld [vmem:[%s477] sm:$0x3]
    %v479 = vperm.slane %v478, 0
    %v480 = vmul.f32 %v29, %v479
    %v481 = vmul.f32 %v34, %v479
    %v482 = vmul.f32 %v39, %v479
    %v483 = vmul.f32 %v44, %v479
    %v484 = vadd.f32 %v69, %v480
    %v485 = vadd.f32 %v74, %v481
    %v486 = vadd.f32 %v79, %v482
    %v487 = vadd.f32 %v84, %v483
    %v488 = vperm.slane %v478, 1
    %v489 = vmul.f32 %v48, %v488
    %v490 = vmul.f32 %v52, %v488
    %v491 = vmul.f32 %v56, %v488
    %v492 = vmul.f32 %v60, %v488
    %v493 = vadd.f32 %v484, %v489
    %v494 = vadd.f32 %v485, %v490
    %v495 = vadd.f32 %v486, %v491
    %v496 = vadd.f32 %v487, %v492
    %v497 = vsub.f32 %v493, %v450
    %v498 = vsub.f32 %v494, %v451
    %v499 = vsub.f32 %v495, %v452
    %v500 = vsub.f32 %v496, %v453
    %v501 = vmul.f32 %v497, 0.5
    %v502 = vmul.f32 %v498, 0.5
    %v503 = vmul.f32 %v499, 0.5
    %v504 = vmul.f32 %v500, 0.5
    %v505 = vadd.f32 %v450, %v501
    %v506 = vadd.f32 %v451, %v502
    %v507 = vadd.f32 %v452, %v503
    %v508 = vadd.f32 %v453, %v504
    %vm509 = vcmp.ge.f32.partialorder %v505, 1.0
    %vm510 = vcmp.ge.f32.partialorder %v506, 1.0
    %vm511 = vcmp.ge.f32.partialorder %v507, 1.0
    %vm512 = vcmp.ge.f32.partialorder %v508, 1.0
    %v513 = vsel %vm509, 1, 0
    %v514 = vsel %vm510, 1, 0
    %v515 = vsel %vm511, 1, 0
    %v516 = vsel %vm512, 1, 0
    %v517 = vcvt.s32.f32 %v513
    %v518 = vcvt.s32.f32 %v514
    %v519 = vcvt.s32.f32 %v515
    %v520 = vcvt.s32.f32 %v516
    %v521 = vsub.f32 1.0, %v517
    %v522 = vsub.f32 1.0, %v518
    %v523 = vsub.f32 1.0, %v519
    %v524 = vsub.f32 1.0, %v520
    %v525 = vmul.f32 %v505, %v521
    %v526 = vmul.f32 %v506, %v522
    %v527 = vmul.f32 %v507, %v523
    %v528 = vmul.f32 %v508, %v524
    %v529 = vmul.f32 %v517, %v93
    %v530 = vmul.f32 %v518, %v98
    %v531 = vmul.f32 %v519, %v103
    %v532 = vmul.f32 %v520, %v108
    %v533 = vadd.f32 %v529, %v530
    %v534 = vadd.f32 %v533, %v531
    %v535 = vadd.f32 %v534, %v532
    %v536 = vrot.slane %v535, 4
    %v537 = vadd.f32 %v535, %v536
    %v538 = vrot.slane %v537, 2
    %v539 = vadd.f32 %v537, %v538
    %v540 = vrot.slane %v539, 1
    %v541 = vadd.f32 %v539, %v540
    %v542 = vadd.f32 %v541, %v171
    %v543 = vsub.f32 %v542, %v475
    %v544 = vmul.f32 %v543, 0.5
    %v545 = vadd.f32 %v475, %v544
    %vm546 = vcmp.ge.f32.partialorder %v545, 1.0
    %v547 = vsel %vm546, 1, 0
    %v548 = vcvt.s32.f32 %v547
    %v549 = vsub.f32 1.0, %v548
    %v550 = vmul.f32 %v545, %v549
    %v551 = vadd.f32 %v476, %v548
    %s552 = scalar_lea.vmem %s0, 12
    %v553 = vld [vmem:[%s552] sm:$0x3]
    %v554 = vperm.slane %v553, 0
    %v555 = vmul.f32 %v29, %v554
    %v556 = vmul.f32 %v34, %v554
    %v557 = vmul.f32 %v39, %v554
    %v558 = vmul.f32 %v44, %v554
    %v559 = vadd.f32 %v69, %v555
    %v560 = vadd.f32 %v74, %v556
    %v561 = vadd.f32 %v79, %v557
    %v562 = vadd.f32 %v84, %v558
    %v563 = vperm.slane %v553, 1
    %v564 = vmul.f32 %v48, %v563
    %v565 = vmul.f32 %v52, %v563
    %v566 = vmul.f32 %v56, %v563
    %v567 = vmul.f32 %v60, %v563
    %v568 = vadd.f32 %v559, %v564
    %v569 = vadd.f32 %v560, %v565
    %v570 = vadd.f32 %v561, %v566
    %v571 = vadd.f32 %v562, %v567
    %v572 = vsub.f32 %v568, %v525
    %v573 = vsub.f32 %v569, %v526
    %v574 = vsub.f32 %v570, %v527
    %v575 = vsub.f32 %v571, %v528
    %v576 = vmul.f32 %v572, 0.5
    %v577 = vmul.f32 %v573, 0.5
    %v578 = vmul.f32 %v574, 0.5
    %v579 = vmul.f32 %v575, 0.5
    %v580 = vadd.f32 %v525, %v576
    %v581 = vadd.f32 %v526, %v577
    %v582 = vadd.f32 %v527, %v578
    %v583 = vadd.f32 %v528, %v579
    %vm584 = vcmp.ge.f32.partialorder %v580, 1.0
    %vm585 = vcmp.ge.f32.partialorder %v581, 1.0
    %vm586 = vcmp.ge.f32.partialorder %v582, 1.0
    %vm587 = vcmp.ge.f32.partialorder %v583, 1.0
    %v588 = vsel %vm584, 1, 0
    %v589 = vsel %vm585, 1, 0
    %v590 = vsel %vm586, 1, 0
    %v591 = vsel %vm587, 1, 0
    %v592 = vcvt.s32.f32 %v588
    %v593 = vcvt.s32.f32 %v589
    %v594 = vcvt.s32.f32 %v590
    %v595 = vcvt.s32.f32 %v591
    %v596 = vsub.f32 1.0, %v592
    %v597 = vsub.f32 1.0, %v593
    %v598 = vsub.f32 1.0, %v594
    %v599 = vsub.f32 1.0, %v595
    %v600 = vmul.f32 %v580, %v596
    %v601 = vmul.f32 %v581, %v597
    %v602 = vmul.f32 %v582, %v598
    %v603 = vmul.f32 %v583, %v599
    %v604 = vmul.f32 %v592, %v93
    %v605 = vmul.f32 %v593, %v98
    %v606 = vmul.f32 %v594, %v103
    %v607 = vmul.f32 %v595, %v108
    %v608 = vadd.f32 %v604, %v605
    %v609 = vadd.f32 %v608, %v606
    %v610 = vadd.f32 %v609, %v607
    %v611 = vrot.slane %v610, 4
    %v612 = vadd.f32 %v610, %v611
    %v613 = vrot.slane %v612, 2
    %v614 = vadd.f32 %v612, %v613
    %v615 = vrot.slane %v614, 1
    %v616 = vadd.f32 %v614, %v615
    %v617 = vadd.f32 %v616, %v171
    %v618 = vsub.f32 %v617, %v550
    %v619 = vmul.f32 %v618, 0.5
    %v620 = vadd.f32 %v550, %v619
    %vm621 = vcmp.ge.f32.partialorder %v620, 1.0
    %v622 = vsel %vm621, 1, 0
    %v623 = vcvt.s32.f32 %v622
    %v624 = vsub.f32 1.0, %v623
    %v625 = vmul.f32 %v620, %v624
    %v626 = vadd.f32 %v551, %v623
    %s627 = scalar_lea.vmem %s0, 14
    %v628 = vld [vmem:[%s627] sm:$0x3]
    %v629 = vperm.slane %v628, 0
    %v630 = vmul.f32 %v29, %v629
    %v631 = vmul.f32 %v34, %v629
    %v632 = vmul.f32 %v39, %v629
    %v633 = vmul.f32 %v44, %v629
    %v634 = vadd.f32 %v69, %v630
    %v635 = vadd.f32 %v74, %v631
    %v636 = vadd.f32 %v79, %v632
    %v637 = vadd.f32 %v84, %v633
    %v638 = vperm.slane %v628, 1
    %v639 = vmul.f32 %v48, %v638
    %v640 = vmul.f32 %v52, %v638
    %v641 = vmul.f32 %v56, %v638
    %v642 = vmul.f32 %v60, %v638
    %v643 = vadd.f32 %v634, %v639
    %v644 = vadd.f32 %v635, %v640
    %v645 = vadd.f32 %v636, %v641
    %v646 = vadd.f32 %v637, %v642
    %v647 = vsub.f32 %v643, %v600
    %v648 = vsub.f32 %v644, %v601
    %v649 = vsub.f32 %v645, %v602
    %v650 = vsub.f32 %v646, %v603
    %v651 = vmul.f32 %v647, 0.5
    %v652 = vmul.f32 %v648, 0.5
    %v653 = vmul.f32 %v649, 0.5
    %v654 = vmul.f32 %v650, 0.5
    %v655 = vadd.f32 %v600, %v651
    %v656 = vadd.f32 %v601, %v652
    %v657 = vadd.f32 %v602, %v653
    %v658 = vadd.f32 %v603, %v654
    %vm659 = vcmp.ge.f32.partialorder %v655, 1.0
    %vm660 = vcmp.ge.f32.partialorder %v656, 1.0
    %vm661 = vcmp.ge.f32.partialorder %v657, 1.0
    %vm662 = vcmp.ge.f32.partialorder %v658, 1.0
    %v663 = vsel %vm659, 1, 0
    %v664 = vsel %vm660, 1, 0
    %v665 = vsel %vm661, 1, 0
    %v666 = vsel %vm662, 1, 0
    %v667 = vcvt.s32.f32 %v663
    %v668 = vcvt.s32.f32 %v664
    %v669 = vcvt.s32.f32 %v665
    %v670 = vcvt.s32.f32 %v666
    %v671 = vmul.f32 %v667, %v93
    %v672 = vmul.f32 %v668, %v98
    %v673 = vmul.f32 %v669, %v103
    %v674 = vmul.f32 %v670, %v108
    %v675 = vadd.f32 %v671, %v672
    %v676 = vadd.f32 %v675, %v673
    %v677 = vadd.f32 %v676, %v674
    %v678 = vrot.slane %v677, 4
    %v679 = vadd.f32 %v677, %v678
    %v680 = vrot.slane %v679, 2
    %v681 = vadd.f32 %v679, %v680
    %v682 = vrot.slane %v681, 1
    %v683 = vadd.f32 %v681, %v682
    %v684 = vadd.f32 %v683, %v171
    %v685 = vsub.f32 %v684, %v625
    %v686 = vmul.f32 %v685, 0.5
    %v687 = vadd.f32 %v625, %v686
    %vm688 = vcmp.ge.f32.partialorder %v687, 1.0
    %v689 = vsel %vm688, 1, 0
    %v690 = vcvt.s32.f32 %v689
    %v691 = vadd.f32 %v626, %v690
    %692 = vst [vmem:[#allocation3] sm:$0x1] %v691
    // Predicated region
    $region22: #{tpu_custom_call.1} parent=1 // pred_check
      _
    $region23: #{tpu_custom_call.1} parent=1 // pred_check_branch
      %694 = sbr.rel (0) target = $region25
    $region24: #{tpu_custom_call.1} parent=1 // pred_region
      %696 = vsyncadd [#allocation4], 0
      %s698 = sshll.u32 [#allocation3], 4
      %s699 = int_to_ptr.vmem [resolvable:$true] %s698
      %s700 = sshll.u32 %s5, 4
      %s701 = int_to_ptr.hbm [resolvable:$true] %s700
      %703 = dma.vmem_to_hbm [thread:$0]  %s699, 16, %s701, [#allocation4]
    $region25: #{tpu_custom_call.1} parent=1 // pred_fallthru
      _
    // Predicated region
    $region26: #{tpu_custom_call.1} parent=1 // pred_check
      _
    $region27: #{tpu_custom_call.1} parent=1 // pred_check_branch
      %705 = sbr.rel (0) target = $region29
    $region28: #{tpu_custom_call.1} parent=1 // pred_region
      %707 = dma.done [#allocation4], 16
    $region29: #{tpu_custom_call.1} parent=1 // pred_fallthru
      _
    %708 = vsyncpa [#allocation4], 1

</llo_original>
